<compile_context>
chip_gen: v5e
topology: v5e:2x2
jax: 0.10.0
libtpu: 0.0.40
codegen_flags: <defaults>
</compile_context>

<pallas_src>
import jax
import jax.numpy as jnp
import numpy as np
from jax.experimental import pallas as pl
from jax.experimental.pallas import tpu as pltpu


# ----------------------------------------------------------------------------
# Configuration mirroring DynamicEmbedder.__init__ / EnvironmentBatcher.
# ----------------------------------------------------------------------------
EMBEDDING_SIZE = 32
HIERARCHICAL = True
ZERO_OUT_NONEXISTENT = True
SHARE_CARD_EMBEDDINGS_WITH_PREVIOUS = False
USE_PREVIOUS_CARDS = True

# per-property vocabulary sizes (stand-ins for batcher.get_*())
N_CARD_COUNTS = 4
N_CARD_COLORS = 8
N_CARD_SHAPES = 4
N_CARD_SELECTIONS = 2
N_LEADER_ROT = 4
N_FOLLOWER_ROT = 4

PROP_NAMES = ["card_counts", "card_colors", "card_shapes", "card_selections",
              "leader_rotation", "follower_rotation"]
PREV_PROP_NAMES = ["prev_visited_card_counts", "prev_visited_card_colors",
                   "prev_visited_card_shapes", "prev_visited_card_selections"]


def property_vocabs_and_offsets():
    """Replicates the prefix_length bookkeeping in DynamicEmbedder.forward."""
    vocabs = [N_CARD_COUNTS, N_CARD_COLORS, N_CARD_SHAPES, N_CARD_SELECTIONS,
              N_LEADER_ROT, N_FOLLOWER_ROT]
    offsets = []
    prefix = 0
    for v in vocabs:
        offsets.append(prefix)
        prefix += v
    if USE_PREVIOUS_CARDS:
        prev_vocabs = [N_CARD_COUNTS, N_CARD_COLORS, N_CARD_SHAPES,
                       N_CARD_SELECTIONS]
        if SHARE_CARD_EMBEDDINGS_WITH_PREVIOUS:
            prefix = 0
        for v in prev_vocabs:
            offsets.append(prefix)
            prefix += v
        vocabs = vocabs + prev_vocabs
    num_embeddings = max(o + v for o, v in zip(offsets, vocabs))
    return vocabs, offsets, num_embeddings


def _round_up(x, m):
    return (x + m - 1) // m * m


# ----------------------------------------------------------------------------
# Pallas kernel: bf16 selector broadcast + single fused grouped f32 matmul.
# ----------------------------------------------------------------------------
def _dynamic_embedder_kernel(idx_ref, selT_ref, tabT_ref, out_ref):
    # idx_ref:  (1, Pp, TN) bf16  offset property ids, mask folded in as -1
    # selT_ref: (Vp, Pp)    bf16  static 0/1 ownership: vocab row -> owning prop
    # tabT_ref: (GE, Vp)    f32   grouped (block-structured) embedding table^T
    # out_ref:  (1, GE, TN)       channels x pixels (lane-dense)
    ids = idx_ref[0]                                                # (Pp, TN)

    # Broadcast each pixel's (masked) id into the vocab rows its property owns:
    # one tiny bf16 MXU matmul; exact since ids <= num_emb < 256, selT in {0,1}.
    ids_b = jnp.dot(selT_ref[...], ids,
                    preferred_element_type=jnp.float32)             # (Vp, TN)

    # Column iota broadcast along lanes; masked pixels carry -1 and never match.
    row = jax.lax.broadcasted_iota(
        jnp.int32, (ids_b.shape[0], 1), 0).astype(jnp.float32)      # (Vp, 1)
    acc = (ids_b == row).astype(jnp.float32)                        # (Vp, TN)

    # One fused matmul produces all G group sums at once; lane axis = pixels
    # (multiple of 128) -> full-width unmasked stores.
    out_ref[0] = jnp.dot(tabT_ref[...], acc,
                         preferred_element_type=jnp.float32
                         ).astype(out_ref.dtype)                    # (GE, TN)


# ----------------------------------------------------------------------------
# Forward wrapper (glue): offsets, mask fold, padding, constants, pallas_call.
# ----------------------------------------------------------------------------
def dynamic_embedder_forward(table, batch, *, tile_pixels=2048,
                             out_dtype=jnp.float32):
    vocabs, offsets, num_emb = property_vocabs_and_offsets()
    prop_names = PROP_NAMES + (PREV_PROP_NAMES if USE_PREVIOUS_CARDS else [])
    n_props = len(prop_names)

    b, h, w = batch[prop_names[0]].shape
    hw = h * w
    emb = table.shape[1]

    if HIERARCHICAL:
        groups = [(0, 4), (4, 6)]
        if USE_PREVIOUS_CARDS:
            groups.append((6, n_props))
    else:
        groups = [(0, n_props)]
    g = len(groups)
    ge = g * emb

    # ---- static sizes --------------------------------------------------------
    # selT / tabT blocks equal the full array dims, so only sublane (x8)
    # alignment is needed for the (Vp, TN) intermediates -> Vp = 48, not 128.
    vp = _round_up(num_emb, 8)
    p_pad = _round_up(n_props, 16)          # bf16 sublane tile is 16
    # bf16 ids must stay exactly representable for the == compare.
    assert num_emb <= 256, "ids must be exact in bf16 for the equality test"

    # ---- static selector (vocab row -> owning property), bf16 ---------------
    sel = np.zeros((vp, p_pad), np.float32)
    for pi, (off, v) in enumerate(zip(offsets, vocabs)):
        sel[off:off + v, pi] = 1.0
    # TODO(synk): the fused single-matmul path requires disjoint per-property
    # vocab ranges; share_card_embeddings_with_previous=True would need a
    # per-group accumulator fallback.
    assert sel.sum(axis=1).max() <= 1.0, "vocab ranges must be disjoint"
    selT = jnp.asarray(sel, dtype=jnp.bfloat16)

    # ---- grouped table^T (GE, Vp), built in one tile*mask expression --------
    grp_of_vocab = np.full((num_emb,), -1, np.int64)
    for gi, (lo, hi) in enumerate(groups):
        for pi in range(lo, hi):
            grp_of_vocab[offsets[pi]:offsets[pi] + vocabs[pi]] = gi
    block_mask = (np.arange(g)[:, None] == grp_of_vocab[None, :])
    block_mask = np.repeat(block_mask, emb, axis=0).astype(np.float32)
    block_mask = np.pad(block_mask, ((0, 0), (0, vp - num_emb)))
    tabT = jnp.pad(jnp.tile(table.astype(jnp.float32).T, (g, 1)),
                   ((0, 0), (0, vp - num_emb))) * jnp.asarray(block_mask)

    # ---- runtime input: one fused pass -> (B, Pp, HW) bf16 masked ids -------
    props = jnp.stack([batch[name].astype(jnp.int32) for name in prop_names],
                      axis=1)                                   # (B, P, H, W)
    off_arr = jnp.asarray(np.asarray(offsets, np.int32)).reshape(1, n_props,
                                                                 1, 1)
    ids = props + off_arr
    if ZERO_OUT_NONEXISTENT:
        mask = batch["nonempty_property_mask"]
        if not USE_PREVIOUS_CARDS:
            mask = mask[:, :n_props]
        # TODO(synk): sentinel fold is exact only for 0/1 masks; fractional
        # masks would need the exact-multiply (two-operand) kernel variant.
        ids = jnp.where(mask != 0, ids, -1)
    ids = ids.astype(jnp.bfloat16).reshape(b, n_props, hw)

    # Tile / pad the pixel axis so any B*H*W works; padded pixels / padded
    # property rows get the sentinel so they contribute nothing.
    tn = min(tile_pixels, _round_up(hw, 128))
    hw_pad = _round_up(hw, tn)
    # v7x has 2 TensorCores; make sure the "parallel" grid has >= 2 steps.
    if b * (hw_pad // tn) < 2 and tn >= 256:
        tn = _round_up(hw_pad // 2, 128)
        hw_pad = _round_up(hw, tn)
    idx = jnp.pad(ids, ((0, 0), (0, p_pad - n_props), (0, hw_pad - hw)),
                  constant_values=-1)

    grid = (b, hw_pad // tn)
    flops = 2 * b * hw_pad * vp * (p_pad + ge)
    bytes_accessed = (2 * b * p_pad * hw_pad                       # idx bf16
                      + np.dtype(out_dtype).itemsize * b * ge * hw_pad
                      + 2 * int(selT.size) + 4 * int(tabT.size))

    out = pl.pallas_call(
        _dynamic_embedder_kernel,
        out_shape=jax.ShapeDtypeStruct((b, ge, hw_pad), out_dtype),
        grid=grid,
        in_specs=[
            pl.BlockSpec((1, p_pad, tn), lambda bi, ti: (bi, 0, ti)),
            pl.BlockSpec((vp, p_pad), lambda bi, ti: (0, 0)),
            pl.BlockSpec((ge, vp), lambda bi, ti: (0, 0)),
        ],
        out_specs=pl.BlockSpec((1, ge, tn), lambda bi, ti: (bi, 0, ti)),
        compiler_params=pltpu.CompilerParams(
            dimension_semantics=("parallel", "parallel")),
        cost_estimate=pl.CostEstimate(
            flops=flops, transcendentals=0, bytes_accessed=bytes_accessed),
    )(idx, selT, tabT)

    # Already channels-first: (B, G*E, H*W) -> NCHW, no transpose needed.
    return out[:, :, :hw].reshape(b, ge, h, w)


# ----------------------------------------------------------------------------
# Pure-JAX reference (mirrors the PyTorch forward line by line).
# ----------------------------------------------------------------------------
def reference_forward(table, batch):
    vocabs, offsets, _ = property_vocabs_and_offsets()
    prop_names = PROP_NAMES + (PREV_PROP_NAMES if USE_PREVIOUS_CARDS else [])
    props = [batch[name].astype(jnp.int32) + off
             for name, off in zip(prop_names, offsets)]
    stacked = jnp.stack(props, axis=0)                  # (P, B, H, W)
    emb = jnp.take(table, stacked, axis=0)              # (P, B, H, W, E)
    emb = jnp.transpose(emb, (1, 0, 4, 2, 3))           # (B, P, E, H, W)
    if ZERO_OUT_NONEXISTENT:
        mask = batch["nonempty_property_mask"].astype(jnp.float32)
        if not USE_PREVIOUS_CARDS:
            mask = mask[:, :-4]
        emb = emb * mask[:, :, None, :, :]
    if HIERARCHICAL:
        cur = jnp.sum(emb[:, :4], axis=1)
        ply = jnp.sum(emb[:, 4:6], axis=1)
        out = jnp.concatenate([cur, ply], axis=1)
        if USE_PREVIOUS_CARDS:
            prev = jnp.sum(emb[:, 6:], axis=1)
            out = jnp.concatenate([out, prev], axis=1)
        return out
    return jnp.sum(emb, axis=1)


# ----------------------------------------------------------------------------
if __name__ == "__main__":
    key = jax.random.PRNGKey(0)
    B, H, W = 2, 16, 16

    vocabs, offsets, num_embeddings = property_vocabs_and_offsets()

    # nn.Embedding weight, xavier_normal_ init (deterministic).
    key, k_tab = jax.random.split(key)
    std = float(np.sqrt(2.0 / (num_embeddings + EMBEDDING_SIZE)))
    table = jax.random.normal(k_tab, (num_embeddings, EMBEDDING_SIZE),
                              jnp.float32) * std

    # Synthetic DynamicEnvironmentBatch.
    prop_names = PROP_NAMES + PREV_PROP_NAMES
    batch = {}
    for name, v in zip(prop_names, vocabs):
        key, k = jax.random.split(key)
        batch[name] = jax.random.randint(k, (B, H, W), 0, v, dtype=jnp.int32)
    key, k = jax.random.split(key)
    batch["nonempty_property_mask"] = (
        jax.random.uniform(k, (B, 10, H, W)) > 0.3).astype(jnp.float32)

    out = dynamic_embedder_forward(table, batch)
    out = jax.block_until_ready(out)
    ref = jax.block_until_ready(reference_forward(table, batch))

    assert out.shape == ref.shape, (out.shape, ref.shape)
    np.testing.assert_allclose(np.asarray(out), np.asarray(ref),
                               rtol=1e-5, atol=1e-5)
    print("KERNEL_OK")
</pallas_src>

<mosaic_0001>
module attributes {stable_mosaic.version = 11 : i64} {
  func.func @_dynamic_embedder_kernel(%arg0: i32, %arg1: i32, %arg2: memref<1x16x256xbf16, #tpu.memory_space<vmem>>, %arg3: memref<48x16xbf16, #tpu.memory_space<vmem>>, %arg4: memref<96x48xf32, #tpu.memory_space<vmem>>, %arg5: memref<1x96x256xf32, #tpu.memory_space<vmem>>) attributes {dimension_semantics = [#tpu.dimension_semantics<parallel>, #tpu.dimension_semantics<parallel>], iteration_bounds = array<i64: 2, 1>, scalar_prefetch = 0 : i64, scratch_operands = 0 : i64, tpu.core_type = #tpu.core_type<tc>, window_params = [{transform_indices = @transform_0, window_bounds = array<i64: 1, 16, 256>}, {pipeline_mode = #tpu.pipeline_mode<synchronous>, transform_indices = @transform_1, window_bounds = array<i64: 48, 16>}, {pipeline_mode = #tpu.pipeline_mode<synchronous>, transform_indices = @transform_2, window_bounds = array<i64: 96, 48>}, {transform_indices = @transform_3, window_bounds = array<i64: 1, 96, 256>}]} {
    %c0 = arith.constant 0 : index
    %c0_0 = arith.constant 0 : index
    %c0_1 = arith.constant 0 : index
    %0 = vector.load %arg2[%c0, %c0_0, %c0_1] : memref<1x16x256xbf16, #tpu.memory_space<vmem>>, vector<1x16x256xbf16>
    %1 = vector.shape_cast %0 : vector<1x16x256xbf16> to vector<16x256xbf16>
    %c0_2 = arith.constant 0 : index
    %c0_3 = arith.constant 0 : index
    %2 = vector.load %arg3[%c0_2, %c0_3] : memref<48x16xbf16, #tpu.memory_space<vmem>>, vector<48x16xbf16>
    %cst = arith.constant dense<0.000000e+00> : vector<48x256xf32>
    %3 = tpu.matmul %2, %1, %cst {dimension_numbers = #tpu.dot_dimension_numbers<[1], [0], [0], [1], [0, 0, 1, 1], [], []>} : vector<48x16xbf16>, vector<16x256xbf16>, vector<48x256xf32> -> vector<48x256xf32>
    %4 = tpu.iota {dimensions = array<i32: 0>} : vector<48x1xi32>
    %5 = arith.sitofp %4 : vector<48x1xi32> to vector<48x1xf32>
    %6 = vector.broadcast %5 : vector<48x1xf32> to vector<48x256xf32>
    %7 = arith.cmpf oeq, %3, %6 : vector<48x256xf32>
    %8 = arith.extui %7 : vector<48x256xi1> to vector<48x256xi32>
    %9 = arith.sitofp %8 : vector<48x256xi32> to vector<48x256xf32>
    %c0_4 = arith.constant 0 : index
    %c0_5 = arith.constant 0 : index
    %10 = vector.load %arg4[%c0_4, %c0_5] : memref<96x48xf32, #tpu.memory_space<vmem>>, vector<96x48xf32>
    %cst_6 = arith.constant dense<0.000000e+00> : vector<96x256xf32>
    %11 = tpu.matmul %10, %9, %cst_6 {dimension_numbers = #tpu.dot_dimension_numbers<[1], [0], [0], [1], [0, 0, 1, 1], [], []>} : vector<96x48xf32>, vector<48x256xf32>, vector<96x256xf32> -> vector<96x256xf32>
    %c0_7 = arith.constant 0 : index
    %c0_8 = arith.constant 0 : index
    %c0_9 = arith.constant 0 : index
    %12 = vector.load %arg5[%c0_7, %c0_8, %c0_9] : memref<1x96x256xf32, #tpu.memory_space<vmem>>, vector<1x96x256xf32>
    %13 = vector.shape_cast %12 : vector<1x96x256xf32> to vector<96x256xf32>
    %14 = vector.shape_cast %11 : vector<96x256xf32> to vector<1x96x256xf32>
    tpu.vector_store %arg5[%c0_7, %c0_8, %c0_9], %14 {strides = array<i32>} : memref<1x96x256xf32, #tpu.memory_space<vmem>>, vector<1x96x256xf32>,
    return
  }
  func.func @transform_0(%arg0: i32, %arg1: i32) -> (i32, i32, i32) {
    %c0_i32 = arith.constant 0 : i32
    %c0_i32_0 = arith.constant 0 : i32
    return %arg0, %c0_i32, %arg1 : i32, i32, i32
  }
  func.func @transform_1(%arg0: i32, %arg1: i32) -> (i32, i32) {
    %c0_i32 = arith.constant 0 : i32
    %c0_i32_0 = arith.constant 0 : i32
    %c0_i32_1 = arith.constant 0 : i32
    return %c0_i32, %c0_i32_0 : i32, i32
  }
  func.func @transform_2(%arg0: i32, %arg1: i32) -> (i32, i32) {
    %c0_i32 = arith.constant 0 : i32
    %c0_i32_0 = arith.constant 0 : i32
    %c0_i32_1 = arith.constant 0 : i32
    return %c0_i32, %c0_i32_0 : i32, i32
  }
  func.func @transform_3(%arg0: i32, %arg1: i32) -> (i32, i32, i32) {
    %c0_i32 = arith.constant 0 : i32
    %c0_i32_0 = arith.constant 0 : i32
    return %arg0, %c0_i32, %arg1 : i32, i32, i32
  }
}

</mosaic_0001>

<llo_original>
// kernel: tpu_custom_call.1
$region0: #{tpu_custom_call.1}
  #allocation0 [shape = 'u32[]', space=smem, size = 0x4, offset = 0x4, fixed_abs, tag = 'smem constant byte address 0x4 - core index']
  #allocation1 [shape = 'u32[72,128]{1,0:T(1,128)}', space=vmem, size = 0x9000, scoped, tag = 'internal scratch']
  %s0 = inlined_call_operand.vmem [shape: bf16[2,16,256], index: 0, kind: input, shape index: {}]
  %s1 = inlined_call_operand.vmem [shape: bf16[48,16], index: 1, kind: input, shape index: {}]
  %s2 = inlined_call_operand.vmem [shape: f32[96,48], index: 2, kind: input, shape index: {}]
  %s3 = inlined_call_operand.hbm [shape: f32[2,96,256], index: 3, kind: output, shape index: {}]
  %s4 = sld [smem:[#allocation0]]
  $region45: #{tpu_custom_call.1} parent=0
    _
  %s6 = ssub.s32 1, %s4
  %s7 = scalar_select 0, %s6, %s4
  $region1: #{tpu_custom_call.1} parent=0
    #allocation2 [shape = 'u8[196608]{0}', space=vmem, size = 0x30000, scoped, tag = 'output window, operand 0']
    #allocation3 [shape = 's32[2]{0}', space=sflag, size = 0x8, scoped, tag = 'scoped memory for tpu_custom_call.1']
    %8 = vsyncpa [#allocation3], 0
    %s9 = scalar_lea.sflag [#allocation3], 1
    %10 = vsyncpa %s9, 0
    loop: start=0, step=1, limit=4
    $region2: #{tpu_custom_call.1} parent=1 // loop_pre_header
      _
    $region3: #{tpu_custom_call.1} parent=1 // loop_header
      %s12 = sphi 0, %s16
      %p13 = scmp.ge.s32.totalorder %s12, 4
      %s19 = sphi 0, %s31
      %s20 = sphi 0, %s27
      %s21 = sphi 0, %s19
      %s22 = sphi 0, %s20
      %s23 = sphi 0, %s21
      %s24 = sphi 0, %s22
      %s36 = sphi 0, %s38
      %s39 = sphi 0, %s36
      %s40 = sphi 0, %s39
      %s56 = sphi 0, %s40
      %s60 = sphi 0, %s60
      %s62 = sphi 0, %s60
      %s63 = sphi 0, %s62
      %s77 = sphi 0, %s63
      %s81 = sphi 0, %s81
      %s83 = sphi 0, %s81
      %s84 = sphi 0, %s83
      %s98 = sphi 0, %s84
      %s106 = sphi 0, %s108
      %s109 = sphi 0, %s106
      %s110 = sphi 0, %s109
      %s126 = sphi 0, %s110
    $region4: #{tpu_custom_call.1} parent=1 // loop_header_branch
      %15 = sbr.rel (%p13) target = $region8
    $region5: #{tpu_custom_call.1} parent=1 // loop_body
      %s17 = ssub.s32 %s12, 1
      %s18 = ssub.s32 %s12, 2
      %s25 = sadd.s32 1, %s20
      %p26 = scmp.ge.s32.totalorder %s25, 1
      %s27 = scalar_select %p26, 0, %s25
      %s28 = sadd.s32 1, %s19
      %s29 = scalar_select %p26, %s28, %s19
      %p30 = scmp.ge.s32.totalorder %s29, 2
      %s31 = scalar_select %p30, 0, %s29
      %s32 = ssub.s32 %s19, %s31
      %s33 = ssub.s32 %s20, %s27
      %s34 = sor.u32 %s32, %s33
      %p35 = scmp.eq.s32.totalorder %s34, 0
      %s37 = sadd.s32 %s36, 1
      %s38 = scalar_select %p35, %s36, %s37
      %p41 = pneg %p35
      %p42 = scmp.eq.s32.totalorder %s12, 1
      %p43 = por %p41, %p42
      %p44 = scmp.ne.s32.totalorder %s36, %s39
      %p45 = scmp.eq.s32.totalorder %s12, 0
      %p46 = por %p44, %p45
      %p47 = scmp.ne.s32.totalorder %s36, %s39
      %p48 = scmp.eq.s32.totalorder %s17, 1
      %p49 = por %p47, %p48
      %p50 = scmp.ne.s32.totalorder %s39, %s40
      %p51 = scmp.eq.s32.totalorder %s17, 0
      %p52 = por %p50, %p51
      %p53 = scmp.ne.s32.totalorder %s39, %s40
      %p54 = scmp.eq.s32.totalorder %s18, 1
      %p55 = por %p53, %p54
      %p57 = scmp.ne.s32.totalorder %s40, %s56
      %p58 = scmp.eq.s32.totalorder %s18, 0
      %p59 = por %p57, %p58
      %s61 = sadd.s32 %s60, 1
      %p64 = scmp.eq.s32.totalorder %s12, 1
      %p65 = scmp.ne.s32.totalorder %s60, %s62
      %p66 = scmp.eq.s32.totalorder %s12, 0
      %p67 = por %p65, %p66
      %p68 = scmp.ne.s32.totalorder %s60, %s62
      %p69 = scmp.eq.s32.totalorder %s17, 1
      %p70 = por %p68, %p69
      %p71 = scmp.ne.s32.totalorder %s62, %s63
      %p72 = scmp.eq.s32.totalorder %s17, 0
      %p73 = por %p71, %p72
      %p74 = scmp.ne.s32.totalorder %s62, %s63
      %p75 = scmp.eq.s32.totalorder %s18, 1
      %p76 = por %p74, %p75
      %p78 = scmp.ne.s32.totalorder %s63, %s77
      %p79 = scmp.eq.s32.totalorder %s18, 0
      %p80 = por %p78, %p79
      %s82 = sadd.s32 %s81, 1
      %p85 = scmp.eq.s32.totalorder %s12, 1
      %p86 = scmp.ne.s32.totalorder %s81, %s83
      %p87 = scmp.eq.s32.totalorder %s12, 0
      %p88 = por %p86, %p87
      %p89 = scmp.ne.s32.totalorder %s81, %s83
      %p90 = scmp.eq.s32.totalorder %s17, 1
      %p91 = por %p89, %p90
      %p92 = scmp.ne.s32.totalorder %s83, %s84
      %p93 = scmp.eq.s32.totalorder %s17, 0
      %p94 = por %p92, %p93
      %p95 = scmp.ne.s32.totalorder %s83, %s84
      %p96 = scmp.eq.s32.totalorder %s18, 1
      %p97 = por %p95, %p96
      %p99 = scmp.ne.s32.totalorder %s84, %s98
      %p100 = scmp.eq.s32.totalorder %s18, 0
      %p101 = por %p99, %p100
      %s102 = ssub.s32 %s19, %s31
      %s103 = ssub.s32 %s20, %s27
      %s104 = sor.u32 %s102, %s103
      %p105 = scmp.eq.s32.totalorder %s104, 0
      %s107 = sadd.s32 %s106, 1
      %s108 = scalar_select %p105, %s106, %s107
      %p111 = pneg %p105
      %p112 = scmp.eq.s32.totalorder %s12, 1
      %p113 = por %p111, %p112
      %p114 = scmp.ne.s32.totalorder %s106, %s109
      %p115 = scmp.eq.s32.totalorder %s12, 0
      %p116 = por %p114, %p115
      %p117 = scmp.ne.s32.totalorder %s106, %s109
      %p118 = scmp.eq.s32.totalorder %s17, 1
      %p119 = por %p117, %p118
      %p120 = scmp.ne.s32.totalorder %s109, %s110
      %p121 = scmp.eq.s32.totalorder %s17, 0
      %p122 = por %p120, %p121
      %p123 = scmp.ne.s32.totalorder %s109, %s110
      %p124 = scmp.eq.s32.totalorder %s18, 1
      %p125 = por %p123, %p124
      %p127 = scmp.ne.s32.totalorder %s110, %s126
      %p128 = scmp.eq.s32.totalorder %s18, 0
      %p129 = por %p127, %p128
      %p130 = scmp.le.s32.totalorder 1, %s12
      %p131 = scmp.lt.s32.totalorder %s12, 3
      %p132 = pnand %p130, %p131
      %p133 = pneg %p132
      // Predicated region
      $region9: #{tpu_custom_call.1} parent=5 // pred_check
        _
      $region10: #{tpu_custom_call.1} parent=5 // pred_check_branch
        %135 = sbr.rel (%p132) target = $region12
      $region11: #{tpu_custom_call.1} parent=5 // pred_region
        %s136 = ssub.s32 %s12, 1
        // Predicated region
        $region13: #{tpu_custom_call.1} parent=11 // pred_check
          %p137 = pneg %p73
        $region14: #{tpu_custom_call.1} parent=11 // pred_check_branch
          %139 = sbr.rel (%p137) target = $region16
        $region15: #{tpu_custom_call.1} parent=11 // pred_region
          _
        $region16: #{tpu_custom_call.1} parent=11 // pred_fallthru
          _
        // Predicated region
        $region17: #{tpu_custom_call.1} parent=11 // pred_check
          %p140 = pneg %p94
        $region18: #{tpu_custom_call.1} parent=11 // pred_check_branch
          %142 = sbr.rel (%p140) target = $region20
        $region19: #{tpu_custom_call.1} parent=11 // pred_region
          _
        $region20: #{tpu_custom_call.1} parent=11 // pred_fallthru
          _
      $region12: #{tpu_custom_call.1} parent=5 // pred_fallthru
        _
      %p143 = scmp.lt.s32.totalorder %s12, 2
      // Predicated region
      $region21: #{tpu_custom_call.1} parent=5 // pred_check
        %p144 = pneg %p143
      $region22: #{tpu_custom_call.1} parent=5 // pred_check_branch
        %146 = sbr.rel (%p144) target = $region24
      $region23: #{tpu_custom_call.1} parent=5 // pred_region
        // Predicated region
        $region25: #{tpu_custom_call.1} parent=23 // pred_check
          %p147 = pneg %p46
        $region26: #{tpu_custom_call.1} parent=23 // pred_check_branch
          %149 = sbr.rel (%p147) target = $region28
        $region27: #{tpu_custom_call.1} parent=23 // pred_region
          %s150 = smul.u32 2, %s20
          %p151 = scmp.lt.s32.totalorder %s19, 1
          %s152 = scalar_select %p151, %s19, 1
          %p153 = scmp.lt.s32.totalorder %s150, 1
          %s154 = scalar_select %p153, %s150, 1
          %s155 = smul.addr %s152, 4
          %s156 = sadd.s32 %s154, %s155
          %s157 = smul.addr %s156, 4
          %s158 = scalar_lea.vmem %s0, %s157
          %s159 = smul.u32 2, %s20
        $region28: #{tpu_custom_call.1} parent=23 // pred_fallthru
          _
      $region24: #{tpu_custom_call.1} parent=5 // pred_fallthru
        _
      %p160 = scmp.le.s32.totalorder 1, %s12
      %p161 = scmp.lt.s32.totalorder %s12, 3
      %p162 = pnand %p160, %p161
      %p163 = pneg %p162
      // Predicated region
      $region29: #{tpu_custom_call.1} parent=5 // pred_check
        _
      $region30: #{tpu_custom_call.1} parent=5 // pred_check_branch
        %165 = sbr.rel (%p162) target = $region32
      $region31: #{tpu_custom_call.1} parent=5 // pred_region
        %s166 = ssub.s32 %s12, 1
        %s167 = smul.u32 2, %s22
        %p168 = scmp.lt.s32.totalorder %s21, 1
        %s169 = scalar_select %p168, %s21, 1
        %p170 = scmp.lt.s32.totalorder %s167, 1
        %s171 = scalar_select %p170, %s167, 1
        %s172 = smul.addr %s169, 4
        %s173 = sadd.s32 %s171, %s172
        %s174 = smul.addr %s173, 4
        %s175 = scalar_lea.vmem %s0, %s174
        %p176 = pneg %p52
        %p177 = pneg %p49
        %p178 = pneg %p73
        %p179 = pneg %p70
        %p180 = pneg %p94
        %p181 = pneg %p91
        %p182 = pneg %p122
        %p183 = pneg %p119
        %s184 = sand.u32 %s109, 1
        %s185 = scalar_lea.sflag [#allocation3], %s184
        %s186 = sand.u32 %s109, 1
        %s187 = smul.addr %s186, 192
        %s188 = scalar_lea.vmem [#allocation2], %s187
        %s189 = smul.u32 2, %s22
        %p190 = scmp.lt.s32.totalorder %s21, 1
        %s191 = scalar_select %p190, %s21, 1
        %p192 = scmp.lt.s32.totalorder %s189, 1
        %s193 = scalar_select %p192, %s189, 1
        %s194 = smul.addr %s191, 4
        %s195 = sadd.s32 %s193, %s194
        %s196 = smul.addr %s195, 4
        %s197 = scalar_lea.vmem %s0, %s196
        %s198 = smul.u32 2, %s22
        %s199 = smul.u32 2, %s22
        %v201 = vld [vmem:[%s197] sm:$0xff]
        %v202 = vld [vmem:[%s197 + $0x8] sm:$0xff]
        %v203 = vld [vmem:[%s1] sm:$0xf]
        %v204 = vld [vmem:[%s1 + $0x4] sm:$0xf]
        %v205 = vld [vmem:[%s1 + $0x8] sm:$0xf]
        %v206 = vld [vmem:[%s1 + $0xc] sm:$0xf]
        %v207 = vld [vmem:[%s1 + $0x10] sm:$0xf]
        %v208 = vld [vmem:[%s1 + $0x14] sm:$0xf]
        %v215 = vunpack.c.l.b16 %v203
        %v216 = vunpack.c.l.b16 %v204
        %v217 = vunpack.c.l.b16 %v205
        %v218 = vunpack.c.l.b16 %v206
        %v219 = vunpack.c.l.b16 %v207
        %v220 = vunpack.c.l.b16 %v208
        %v221 = vpack.c.b16 %v216, %v215
        %v222 = vpack.c.b16 %v218, %v217
        %v223 = vpack.c.b16 %v220, %v219
        %v226 = vunpack.c.l.b16 %v201
        %v227 = vunpack.c.h.b16 %v201
        %v228 = vunpack.c.l.b16 %v202
        %v229 = vunpack.c.h.b16 %v202
        %v230 = vpack.c.b16 %v228, %v226
        %v231 = vpack.c.b16 %v229, %v227
        %vm234 = vcmask 130048
        %v236 = vsel %vm234, %v221, 0
        %v239 = vsel %vm234, %v222, 0
        %v242 = vsel %vm234, %v223, 0
        %244 = vmatpush.bf16.msra.mxu0 0
        %245 = vmatpush.bf16.msra.mxu0 0
        %246 = vmatpush.bf16.msra.mxu0 0
        %247 = vmatpush.bf16.msra.mxu0 0
        %248 = vmatpush.bf16.msra.mxu0 0
        %249 = vmatpush.bf16.msra.mxu0 0
        %250 = vmatpush.bf16.msra.mxu0 0
        %251 = vmatpush.bf16.msra.mxu0 %v230
        %252 = vmatmul.bf16.gmra.mxu0 %v236
        %v253 = vpop.f32.mrf.mxu0
        %v254 = vadd.f32 0.0, %v253
        %v255 = vpop.f32.mrf.mxu0
        %v256 = vadd.f32 0.0, %v255
        %257 = vmatmul.bf16.gmra.mxu0 %v239
        %v258 = vpop.f32.mrf.mxu0
        %v259 = vadd.f32 0.0, %v258
        %v260 = vpop.f32.mrf.mxu0
        %v261 = vadd.f32 0.0, %v260
        %262 = vmatmul.bf16.gmra.mxu0 %v242
        %v263 = vpop.f32.mrf.mxu0
        %v264 = vadd.f32 0.0, %v263
        %v265 = vpop.f32.mrf.mxu0
        %v266 = vadd.f32 0.0, %v265
        %267 = vdwg.mxu0
        %268 = vmatpush.bf16.msra.mxu0 0
        %269 = vmatpush.bf16.msra.mxu0 0
        %270 = vmatpush.bf16.msra.mxu0 0
        %271 = vmatpush.bf16.msra.mxu0 0
        %272 = vmatpush.bf16.msra.mxu0 0
        %273 = vmatpush.bf16.msra.mxu0 0
        %274 = vmatpush.bf16.msra.mxu0 0
        %275 = vmatpush.bf16.msra.mxu0 %v231
        %276 = vmatmul.bf16.gmra.mxu0 %v236
        %v277 = vpop.f32.mrf.mxu0
        %v278 = vadd.f32 0.0, %v277
        %v279 = vpop.f32.mrf.mxu0
        %v280 = vadd.f32 0.0, %v279
        %281 = vmatmul.bf16.gmra.mxu0 %v239
        %v282 = vpop.f32.mrf.mxu0
        %v283 = vadd.f32 0.0, %v282
        %v284 = vpop.f32.mrf.mxu0
        %v285 = vadd.f32 0.0, %v284
        %286 = vmatmul.bf16.gmra.mxu0 %v242
        %v287 = vpop.f32.mrf.mxu0
        %v288 = vadd.f32 0.0, %v287
        %v289 = vpop.f32.mrf.mxu0
        %v290 = vadd.f32 0.0, %v289
        %291 = vdwg.mxu0
        %v292 = vlaneseq
        %v293 = vshrl.u32 %v292, 7
        %v294 = vadd.s32 %v293, 8
        %v295 = vadd.s32 %v293, 16
        %v296 = vadd.s32 %v293, 24
        %v297 = vadd.s32 %v293, 32
        %v298 = vadd.s32 %v293, 40
        %v299 = vcvt.s32.f32 %v293
        %v300 = vcvt.s32.f32 %v294
        %v301 = vcvt.s32.f32 %v295
        %v302 = vcvt.s32.f32 %v296
        %v303 = vcvt.s32.f32 %v297
        %v304 = vcvt.s32.f32 %v298
        %vm305 = vcmp.eq.f32.partialorder %v254, %v299
        %vm306 = vcmp.eq.f32.partialorder %v278, %v299
        %vm307 = vcmp.eq.f32.partialorder %v256, %v300
        %vm308 = vcmp.eq.f32.partialorder %v280, %v300
        %vm309 = vcmp.eq.f32.partialorder %v259, %v301
        %vm310 = vcmp.eq.f32.partialorder %v283, %v301
        %vm311 = vcmp.eq.f32.partialorder %v261, %v302
        %vm312 = vcmp.eq.f32.partialorder %v285, %v302
        %vm313 = vcmp.eq.f32.partialorder %v264, %v303
        %vm314 = vcmp.eq.f32.partialorder %v288, %v303
        %vm315 = vcmp.eq.f32.partialorder %v266, %v304
        %vm316 = vcmp.eq.f32.partialorder %v290, %v304
        %v317 = vsel %vm305, 1, 0
        %v318 = vsel %vm306, 1, 0
        %v319 = vsel %vm307, 1, 0
        %v320 = vsel %vm308, 1, 0
        %v321 = vsel %vm309, 1, 0
        %v322 = vsel %vm310, 1, 0
        %v323 = vsel %vm311, 1, 0
        %v324 = vsel %vm312, 1, 0
        %v325 = vsel %vm313, 1, 0
        %v326 = vsel %vm314, 1, 0
        %v327 = vsel %vm315, 1, 0
        %v328 = vsel %vm316, 1, 0
        %v329 = vcvt.s32.f32 %v317
        %v330 = vcvt.s32.f32 %v318
        %v331 = vcvt.s32.f32 %v319
        %v332 = vcvt.s32.f32 %v320
        %v333 = vcvt.s32.f32 %v321
        %v334 = vcvt.s32.f32 %v322
        %v335 = vcvt.s32.f32 %v323
        %v336 = vcvt.s32.f32 %v324
        %v337 = vcvt.s32.f32 %v325
        %v338 = vcvt.s32.f32 %v326
        %v339 = vcvt.s32.f32 %v327
        %v340 = vcvt.s32.f32 %v328
        %v341 = vld [vmem:[%s2] sm:$0xff]
        %v342 = vld [vmem:[%s2 + $0x8] sm:$0xff]
        %v343 = vld [vmem:[%s2 + $0x10] sm:$0xff]
        %v344 = vld [vmem:[%s2 + $0x18] sm:$0xff]
        %v345 = vld [vmem:[%s2 + $0x20] sm:$0xff]
        %v346 = vld [vmem:[%s2 + $0x28] sm:$0xff]
        %v347 = vld [vmem:[%s2 + $0x30] sm:$0xff]
        %v348 = vld [vmem:[%s2 + $0x38] sm:$0xff]
        %v349 = vld [vmem:[%s2 + $0x40] sm:$0xff]
        %v350 = vld [vmem:[%s2 + $0x48] sm:$0xff]
        %v351 = vld [vmem:[%s2 + $0x50] sm:$0xff]
        %v352 = vld [vmem:[%s2 + $0x58] sm:$0xff]
        %vm353 = vcmask 392192
        %v355 = vsel %vm353, %v341, 0
        %v358 = vsel %vm353, %v342, 0
        %v361 = vsel %vm353, %v343, 0
        %v364 = vsel %vm353, %v344, 0
        %v367 = vsel %vm353, %v345, 0
        %v370 = vsel %vm353, %v346, 0
        %v373 = vsel %vm353, %v347, 0
        %v376 = vsel %vm353, %v348, 0
        %v379 = vsel %vm353, %v349, 0
        %v382 = vsel %vm353, %v350, 0
        %v385 = vsel %vm353, %v351, 0
        %v388 = vsel %vm353, %v352, 0
        %390 = vmatpush.msra.mxu0 0.0
        %391 = vmatpush.msra.mxu0 0.0
        %392 = vmatpush.msra.mxu0 0.0
        %393 = vmatpush.msra.mxu0 0.0
        %394 = vmatpush.msra.mxu0 0.0
        %395 = vmatpush.msra.mxu0 0.0
        %396 = vmatpush.msra.mxu0 0.0
        %397 = vmatpush.msra.mxu0 0.0
        %398 = vmatpush.msra.mxu0 0.0
        %399 = vmatpush.msra.mxu0 0.0
        %400 = vmatpush.msra.mxu0 %v339
        %401 = vmatpush.msra.mxu0 %v337
        %402 = vmatpush.msra.mxu0 %v335
        %403 = vmatpush.msra.mxu0 %v333
        %404 = vmatpush.msra.mxu0 %v331
        %405 = vmatpush.msra.mxu0 %v329
        %406 = vmatmul.f32.gmra.mxu0 %v355
        %v407 = vpop.f32.mrf.mxu0
        %v408 = vadd.f32 0.0, %v407
        %409 = vmatmul.f32.gmra.mxu0 %v358
        %v410 = vpop.f32.mrf.mxu0
        %v411 = vadd.f32 0.0, %v410
        %412 = vmatmul.f32.gmra.mxu0 %v361
        %v413 = vpop.f32.mrf.mxu0
        %v414 = vadd.f32 0.0, %v413
        %415 = vmatmul.f32.gmra.mxu0 %v364
        %v416 = vpop.f32.mrf.mxu0
        %v417 = vadd.f32 0.0, %v416
        %418 = vmatmul.f32.gmra.mxu0 %v367
        %v419 = vpop.f32.mrf.mxu0
        %v420 = vadd.f32 0.0, %v419
        %421 = vmatmul.f32.gmra.mxu0 %v370
        %v422 = vpop.f32.mrf.mxu0
        %v423 = vadd.f32 0.0, %v422
        %424 = vmatmul.f32.gmra.mxu0 %v373
        %v425 = vpop.f32.mrf.mxu0
        %v426 = vadd.f32 0.0, %v425
        %427 = vmatmul.f32.gmra.mxu0 %v376
        %v428 = vpop.f32.mrf.mxu0
        %v429 = vadd.f32 0.0, %v428
        %430 = vmatmul.f32.gmra.mxu0 %v379
        %v431 = vpop.f32.mrf.mxu0
        %v432 = vadd.f32 0.0, %v431
        %433 = vmatmul.f32.gmra.mxu0 %v382
        %v434 = vpop.f32.mrf.mxu0
        %v435 = vadd.f32 0.0, %v434
        %436 = vmatmul.f32.gmra.mxu0 %v385
        %v437 = vpop.f32.mrf.mxu0
        %v438 = vadd.f32 0.0, %v437
        %439 = vmatmul.f32.gmra.mxu0 %v388
        %v440 = vpop.f32.mrf.mxu0
        %v441 = vadd.f32 0.0, %v440
        %442 = vdwg.mxu0
        %443 = vmatpush.msra.mxu0 0.0
        %444 = vmatpush.msra.mxu0 0.0
        %445 = vmatpush.msra.mxu0 0.0
        %446 = vmatpush.msra.mxu0 0.0
        %447 = vmatpush.msra.mxu0 0.0
        %448 = vmatpush.msra.mxu0 0.0
        %449 = vmatpush.msra.mxu0 0.0
        %450 = vmatpush.msra.mxu0 0.0
        %451 = vmatpush.msra.mxu0 0.0
        %452 = vmatpush.msra.mxu0 0.0
        %453 = vmatpush.msra.mxu0 %v340
        %454 = vmatpush.msra.mxu0 %v338
        %455 = vmatpush.msra.mxu0 %v336
        %456 = vmatpush.msra.mxu0 %v334
        %457 = vmatpush.msra.mxu0 %v332
        %458 = vmatpush.msra.mxu0 %v330
        %459 = vmatmul.f32.gmra.mxu0 %v355
        %v460 = vpop.f32.mrf.mxu0
        %v461 = vadd.f32 0.0, %v460
        %462 = vmatmul.f32.gmra.mxu0 %v358
        %v463 = vpop.f32.mrf.mxu0
        %v464 = vadd.f32 0.0, %v463
        %465 = vmatmul.f32.gmra.mxu0 %v361
        %v466 = vpop.f32.mrf.mxu0
        %v467 = vadd.f32 0.0, %v466
        %468 = vmatmul.f32.gmra.mxu0 %v364
        %v469 = vpop.f32.mrf.mxu0
        %v470 = vadd.f32 0.0, %v469
        %471 = vmatmul.f32.gmra.mxu0 %v367
        %v472 = vpop.f32.mrf.mxu0
        %v473 = vadd.f32 0.0, %v472
        %474 = vmatmul.f32.gmra.mxu0 %v370
        %v475 = vpop.f32.mrf.mxu0
        %v476 = vadd.f32 0.0, %v475
        %477 = vmatmul.f32.gmra.mxu0 %v373
        %v478 = vpop.f32.mrf.mxu0
        %v479 = vadd.f32 0.0, %v478
        %480 = vmatmul.f32.gmra.mxu0 %v376
        %v481 = vpop.f32.mrf.mxu0
        %v482 = vadd.f32 0.0, %v481
        %483 = vmatmul.f32.gmra.mxu0 %v379
        %v484 = vpop.f32.mrf.mxu0
        %v485 = vadd.f32 0.0, %v484
        %486 = vmatmul.f32.gmra.mxu0 %v382
        %v487 = vpop.f32.mrf.mxu0
        %v488 = vadd.f32 0.0, %v487
        %489 = vmatmul.f32.gmra.mxu0 %v385
        %v490 = vpop.f32.mrf.mxu0
        %v491 = vadd.f32 0.0, %v490
        %492 = vmatmul.f32.gmra.mxu0 %v388
        %v493 = vpop.f32.mrf.mxu0
        %v494 = vadd.f32 0.0, %v493
        %495 = vdwg.mxu0
        %496 = vst [vmem:[%s188] sm:$0xff] %v408
        %497 = vst [vmem:[%s188 + $0x8] sm:$0xff] %v461
        %498 = vst [vmem:[%s188 + $0x10] sm:$0xff] %v411
        %499 = vst [vmem:[%s188 + $0x18] sm:$0xff] %v464
        %500 = vst [vmem:[%s188 + $0x20] sm:$0xff] %v414
        %501 = vst [vmem:[%s188 + $0x28] sm:$0xff] %v467
        %502 = vst [vmem:[%s188 + $0x30] sm:$0xff] %v417
        %503 = vst [vmem:[%s188 + $0x38] sm:$0xff] %v470
        %504 = vst [vmem:[%s188 + $0x40] sm:$0xff] %v420
        %505 = vst [vmem:[%s188 + $0x48] sm:$0xff] %v473
        %506 = vst [vmem:[%s188 + $0x50] sm:$0xff] %v423
        %507 = vst [vmem:[%s188 + $0x58] sm:$0xff] %v476
        %508 = vst [vmem:[%s188 + $0x60] sm:$0xff] %v426
        %509 = vst [vmem:[%s188 + $0x68] sm:$0xff] %v479
        %510 = vst [vmem:[%s188 + $0x70] sm:$0xff] %v429
        %511 = vst [vmem:[%s188 + $0x78] sm:$0xff] %v482
        %512 = vst [vmem:[%s188 + $0x80] sm:$0xff] %v432
        %513 = vst [vmem:[%s188 + $0x88] sm:$0xff] %v485
        %514 = vst [vmem:[%s188 + $0x90] sm:$0xff] %v435
        %515 = vst [vmem:[%s188 + $0x98] sm:$0xff] %v488
        %516 = vst [vmem:[%s188 + $0xa0] sm:$0xff] %v438
        %517 = vst [vmem:[%s188 + $0xa8] sm:$0xff] %v491
        %518 = vst [vmem:[%s188 + $0xb0] sm:$0xff] %v441
        %519 = vst [vmem:[%s188 + $0xb8] sm:$0xff] %v494
        %s520 = sand.u32 %s109, 1
        %s521 = scalar_lea.sflag [#allocation3], %s520
        %s522 = sand.u32 %s109, 1
        %s523 = smul.addr %s522, 192
        %s524 = scalar_lea.vmem [#allocation2], %s523
        // Predicated region
        $region33: #{tpu_custom_call.1} parent=31 // pred_check
          %p525 = pneg %p119
        $region34: #{tpu_custom_call.1} parent=31 // pred_check_branch
          %527 = sbr.rel (%p525) target = $region36
        $region35: #{tpu_custom_call.1} parent=31 // pred_region
          %s528 = smul.u32 2, %s22
          %530 = vsyncadd %s521, 0
          %s531 = smul.addr %s21, 24
          %s532 = sadd.s32 %s528, %s531
          %s533 = smul.addr %s532, 8
          %s534 = scalar_lea.hbm %s3, %s533
          %s535 = sshll.u32 %s524, 4
          %s536 = int_to_ptr.vmem [resolvable:$true] %s535
          %s537 = sshll.u32 %s534, 4
          %s538 = int_to_ptr.hbm [resolvable:$true] %s537
          %543 = dma.vmem_to_hbm [thread:$0]  %s536, 3072, %s538, %s521, 256, 256, 16
        $region36: #{tpu_custom_call.1} parent=31 // pred_fallthru
          _
      $region32: #{tpu_custom_call.1} parent=5 // pred_fallthru
        _
      %p544 = scmp.le.s32.totalorder 2, %s12
      // Predicated region
      $region37: #{tpu_custom_call.1} parent=5 // pred_check
        %p545 = pneg %p544
      $region38: #{tpu_custom_call.1} parent=5 // pred_check_branch
        %547 = sbr.rel (%p545) target = $region40
      $region39: #{tpu_custom_call.1} parent=5 // pred_region
        %s548 = ssub.s32 %s12, 2
        // Predicated region
        $region41: #{tpu_custom_call.1} parent=39 // pred_check
          %p549 = pneg %p125
        $region42: #{tpu_custom_call.1} parent=39 // pred_check_branch
          %551 = sbr.rel (%p549) target = $region44
        $region43: #{tpu_custom_call.1} parent=39 // pred_region
          %s552 = sand.u32 %s110, 1
          %s553 = scalar_lea.sflag [#allocation3], %s552
          %s554 = sand.u32 %s110, 1
          %s555 = smul.addr %s554, 192
          %s556 = scalar_lea.vmem [#allocation2], %s555
          %558 = dma.done %s553, 3072
        $region44: #{tpu_custom_call.1} parent=39 // pred_fallthru
          _
      $region40: #{tpu_custom_call.1} parent=5 // pred_fallthru
        _
    $region6: #{tpu_custom_call.1} parent=1 // loop_footer
      %s16 = sadd.s32 1, %s12
    $region7: #{tpu_custom_call.1} parent=1 // loop_footer_branch
      %11 = sbr.rel target = $region3
    $region8: #{tpu_custom_call.1} parent=1 // loop_exit
      _
    %559 = vsyncpa [#allocation3], 1
    %s560 = scalar_lea.sflag [#allocation3], 1
    %561 = vsyncpa %s560, 1

</llo_original>
